<compile_context>
chip_gen: v6e
topology: v6e:2x2x1
jax: 0.10.0
libtpu: 0.0.40
codegen_flags: <defaults>
</compile_context>

<pallas_src>
import functools

import numpy as np
import jax
import jax.numpy as jnp
from jax.experimental import pallas as pl
from jax.experimental.pallas import tpu as pltpu


# --------------------------------------------------------------------------- #
# Pallas kernel: h = slab @ W16 ; p = onehot(visited_time) @ pattern          #
# --------------------------------------------------------------------------- #
def _improvement_encoder_kernel(slab_ref, w_ref, pat_ref, h_ref, p_ref):
    slab = slab_ref[...]                                   # [T, 16] f32
    t = slab.shape[0]
    pat = pat_ref[...]                                     # [N+1, D] f32 (resident)
    n_pos = pat.shape[0]

    # Node embeddings: cols 8..15 of the slab (vt + pad) multiply zero weight
    # rows of W16, so the result equals feat[:, :8] @ W_combined exactly.
    h_ref[...] = jnp.dot(slab, w_ref[...], preferred_element_type=jnp.float32)

    # Positional embeddings: rebuild onehot(visited_time) in-kernel (cheap VPU
    # work, no HBM zeros) and select rows of the pattern via one MXU matmul.
    vt = slab[:, 8:9].astype(jnp.int32)                    # exact while N+1 < 2^24
    cols = jax.lax.broadcasted_iota(jnp.int32, (t, n_pos), 1)
    onehot = (cols == vt).astype(jnp.float32)              # [T, N+1]
    p_ref[...] = jnp.dot(onehot, pat, preferred_element_type=jnp.float32)


# --------------------------------------------------------------------------- #
# Glue: CPE pattern table (deterministic; cached on (n_position, emb_dim))    #
# --------------------------------------------------------------------------- #
@functools.lru_cache(maxsize=None)
def cyclic_position_embedding_pattern(n_position, emb_dim, mean_pool=True):
    """Cyclic positional embedding pattern (DACT/N2S). Pure numpy precompute."""
    def basesin(v, T, fai=0.0):
        return np.sin(2 * np.pi / T * np.abs(np.mod(v, 2 * T) - T) + fai)

    def basecos(v, T, fai=0.0):
        return np.cos(2 * np.pi / T * np.abs(np.mod(v, 2 * T) - T) + fai)

    half = emb_dim // 2
    skip_base = np.power(n_position, 1.0 / half)
    skip_set = np.linspace(skip_base, n_position, half, dtype="int")
    skip_set = np.maximum(skip_set, 1)
    x = np.zeros((n_position, emb_dim), dtype=np.float64)

    for i in range(emb_dim):
        idx_skip = i // 3 * 3 + 1
        skip = skip_set[idx_skip] if idx_skip < half else skip_set[-1]
        if n_position > skip:
            longer = np.arange(0, np.ceil(n_position / skip) * skip + 0.01, 0.01)
        else:
            longer = np.arange(0, n_position + 0.01, 0.01)
            skip = n_position
        num = len(longer) - 1
        fai = 0.0 if i <= half else 2 * np.pi * ((-i + half) / half)
        sel = np.linspace(0, num, n_position + 1, dtype="int")[:n_position]
        if i % 2 == 1:
            x[:, i] = basecos(longer, skip, fai)[sel]
        else:
            x[:, i] = basesin(longer, skip, fai)[sel]

    pattern = x.astype(np.float32)
    pattern_sum = np.zeros_like(pattern)
    arange = np.arange(n_position)
    pooling = [-2, -1, 0, 1, 2] if mean_pool else [0]
    for d in pooling:
        index = (arange + d + n_position) % n_position
        pattern_sum += pattern[index]
    pattern = pattern_sum / len(pooling) - pattern.mean(0, keepdims=True)
    return pattern


# --------------------------------------------------------------------------- #
# Glue: visited_time from the linked-list tour via pointer doubling           #
# --------------------------------------------------------------------------- #
def compute_visited_time(rec):
    """rec: [B, L] int32 successor list -> visit-order index per node, [B, L].

    Wyllie list ranking: distance-to-node-0 for every node in O(log L)
    fully-vectorized gather steps (vs. O(L) serial pointer chase)."""
    B, L = rec.shape
    rec = rec.astype(jnp.int32)
    is_sink = (jnp.arange(L, dtype=jnp.int32) == 0)[None, :]        # node 0 = start
    nxt = jnp.where(is_sink, 0, rec)                                # sink self-loops
    d = jnp.broadcast_to(jnp.where(is_sink, 0, 1).astype(jnp.int32), (B, L))

    n_steps = max(1, int(np.ceil(np.log2(max(L, 2)))))

    def body(_, carry):
        d, nxt = carry
        d = d + jnp.take_along_axis(d, nxt, axis=1)
        nxt = jnp.take_along_axis(nxt, nxt, axis=1)
        return d, nxt

    d, _ = jax.lax.fori_loop(0, n_steps, body, (d, nxt))
    # d[i] = forward distance i -> 0; visit order of i is L - d[i] (0 for node 0)
    return jnp.where(is_sink, 0, L - d).astype(jnp.int32)


# --------------------------------------------------------------------------- #
# Tile selection (VMEM + megacore aware)                                      #
# --------------------------------------------------------------------------- #
def _pick_tile_rows(rows, n_nodes):
    # Cap the in-kernel (tile_rows, N+1) f32 one-hot temporary at ~4 MiB so the
    # same code path fits v7x's 64 MiB VMEM at large N.
    cap = max(256, (4 * 1024 * 1024) // (4 * max(n_nodes, 1)))
    cap = max(8, (cap // 8) * 8)
    tile = min(1024, cap)
    # Keep >= 2 grid steps whenever there is enough work (v7x: 2 TensorCores
    # split the "parallel" row axis); shrink the tile instead of collapsing
    # the grid to one step.
    while tile > 256 and rows <= tile:
        tile //= 2
    if rows < tile:
        tile = ((rows + 7) // 8) * 8
    return tile


# --------------------------------------------------------------------------- #
# Wrapper (jitted; pattern baked as a constant at trace time)                 #
# --------------------------------------------------------------------------- #
@jax.jit
def improvement_encoder_forward(locs, rec_current, w_depot, w_pick, w_deliv):
    B, n_nodes, _ = locs.shape
    embed_dim = w_depot.shape[1]
    half = (n_nodes - 1) // 2
    f32 = jnp.float32

    # ---- init_embedding features: block-diagonal [x,y | pick,deliv | deliv] --
    depot = locs[:, :1, :].astype(f32)
    pick = locs[:, 1:1 + half, :].astype(f32)
    deliv = locs[:, 1 + half:, :].astype(f32)
    feat = jnp.concatenate([
        jnp.concatenate([depot, jnp.zeros((B, 1, 6), f32)], -1),
        jnp.concatenate([jnp.zeros((B, half, 2), f32), pick, deliv,
                         jnp.zeros((B, half, 2), f32)], -1),
        jnp.concatenate([jnp.zeros((B, half, 6), f32), deliv], -1),
    ], axis=1)                                                       # [B, N+1, 8]

    # ---- pos_embedding glue: visited_time (log-depth) ----
    vt = compute_visited_time(rec_current)                           # [B, N+1] i32

    # ---- flatten the batch into rows; 16-wide LHS slab (NO one-hot zeros) ----
    rows = B * n_nodes
    slab_w = 16                                                      # 8 feat + vt + 7 pad
    slab = jnp.concatenate([
        feat.reshape(rows, 8),
        vt.reshape(rows, 1).astype(f32),                             # vt in column 8
        jnp.zeros((rows, slab_w - 9), f32),
    ], axis=-1)                                                      # [rows, 16]

    tile_rows = _pick_tile_rows(rows, n_nodes)
    rows_p = pl.cdiv(rows, tile_rows) * tile_rows
    if rows_p != rows:
        # Padded rows carry vt=0 -> pattern[0]; sliced off below ([:rows]).
        slab = jnp.concatenate(
            [slab, jnp.zeros((rows_p - rows, slab_w), f32)], axis=0)

    # ---- resident RHS operands (constant index_map -> fetched once) ----
    w_combined = jnp.concatenate([w_depot, w_pick, w_deliv], 0).astype(f32)   # [8, D]
    w16 = jnp.concatenate(
        [w_combined, jnp.zeros((slab_w - 8, embed_dim), f32)], 0)             # [16, D]
    pattern = jnp.asarray(
        cyclic_position_embedding_pattern(n_nodes, embed_dim), f32)           # [N+1, D]

    out_h, out_p = pl.pallas_call(
        _improvement_encoder_kernel,
        out_shape=(
            jax.ShapeDtypeStruct((rows_p, embed_dim), f32),
            jax.ShapeDtypeStruct((rows_p, embed_dim), f32),
        ),
        grid=(rows_p // tile_rows,),
        in_specs=[
            pl.BlockSpec((tile_rows, slab_w), lambda r: (r, 0)),
            pl.BlockSpec((slab_w, embed_dim), lambda r: (0, 0)),     # resident W16
            pl.BlockSpec((n_nodes, embed_dim), lambda r: (0, 0)),    # resident pattern
        ],
        out_specs=[
            pl.BlockSpec((tile_rows, embed_dim), lambda r: (r, 0)),
            pl.BlockSpec((tile_rows, embed_dim), lambda r: (r, 0)),
        ],
        compiler_params=pltpu.CompilerParams(
            dimension_semantics=("parallel",)),
    )(slab, w16, pattern)

    init_h = out_h[:rows].reshape(B, n_nodes, embed_dim)
    init_p = out_p[:rows].reshape(B, n_nodes, embed_dim)

    # TODO(synk): _encoder_forward is abstract in ImprovementEncoder (implemented
    # only by subclasses, e.g. N2S/DACT encoders); base-class semantics end at
    # (init_h, init_p), so pass them through unchanged.
    final_h, final_p = init_h, init_p
    return final_h, final_p


# --------------------------------------------------------------------------- #
# Main                                                                        #
# --------------------------------------------------------------------------- #
if __name__ == "__main__":
    B = 2               # batch
    N_CUST = 8          # 4 pickups + 4 deliveries
    N_NODES = N_CUST + 1
    EMBED_DIM = 128     # module default embed_dim; both outputs lane-dense at D=128

    key = jax.random.PRNGKey(0)
    k_locs, k_rec, k_wd, k_wp, k_wv = jax.random.split(key, 5)

    locs = jax.random.uniform(k_locs, (B, N_NODES, 2), jnp.float32)

    # valid single-cycle linked-list tours
    recs = []
    for b in range(B):
        p = jax.random.permutation(jax.random.fold_in(k_rec, b), N_NODES)
        rec = jnp.zeros((N_NODES,), jnp.int32).at[p].set(jnp.roll(p, -1))
        recs.append(rec)
    rec_current = jnp.stack(recs).astype(jnp.int32)

    # nn.Linear(*, embed_dim, bias=False) weights stored as [in_features, embed_dim]
    w_depot = 0.1 * jax.random.normal(k_wd, (2, EMBED_DIM), jnp.float32)
    w_pick = 0.1 * jax.random.normal(k_wp, (4, EMBED_DIM), jnp.float32)
    w_deliv = 0.1 * jax.random.normal(k_wv, (2, EMBED_DIM), jnp.float32)

    final_h, final_p = improvement_encoder_forward(
        locs, rec_current, w_depot, w_pick, w_deliv)
    jax.block_until_ready((final_h, final_p))

    # lightweight plain-JAX reference check
    half = N_CUST // 2
    depot, pick, deliv = locs[:, :1], locs[:, 1:1 + half], locs[:, 1 + half:]
    ref_h = jnp.concatenate(
        [depot @ w_depot,
         jnp.concatenate([pick, deliv], -1) @ w_pick,
         deliv @ w_deliv], axis=1)
    pattern = jnp.asarray(
        cyclic_position_embedding_pattern(N_NODES, EMBED_DIM), jnp.float32)
    vt = compute_visited_time(rec_current)
    ref_p = pattern[vt]

    assert final_h.shape == (B, N_NODES, EMBED_DIM)
    assert final_p.shape == (B, N_NODES, EMBED_DIM)
    assert jnp.allclose(final_h, ref_h, atol=1e-3, rtol=1e-3)
    assert jnp.allclose(final_p, ref_p, atol=1e-3, rtol=1e-3)

    print("KERNEL_OK")
</pallas_src>

<mosaic_0001>
module attributes {stable_mosaic.version = 11 : i64} {
  func.func @_improvement_encoder_kernel(%arg0: i32, %arg1: memref<24x16xf32, #tpu.memory_space<vmem>>, %arg2: memref<16x128xf32, #tpu.memory_space<vmem>>, %arg3: memref<9x128xf32, #tpu.memory_space<vmem>>, %arg4: memref<24x128xf32, #tpu.memory_space<vmem>>, %arg5: memref<24x128xf32, #tpu.memory_space<vmem>>) attributes {dimension_semantics = [#tpu.dimension_semantics<parallel>], iteration_bounds = array<i64: 1>, scalar_prefetch = 0 : i64, scratch_operands = 0 : i64, tpu.core_type = #tpu.core_type<tc>, window_params = [{transform_indices = @transform_0, window_bounds = array<i64: 24, 16>}, {pipeline_mode = #tpu.pipeline_mode<synchronous>, transform_indices = @transform_1, window_bounds = array<i64: 16, 128>}, {pipeline_mode = #tpu.pipeline_mode<synchronous>, transform_indices = @transform_2, window_bounds = array<i64: 9, 128>}, {transform_indices = @transform_3, window_bounds = array<i64: 24, 128>}, {transform_indices = @transform_4, window_bounds = array<i64: 24, 128>}]} {
    %c0 = arith.constant 0 : index
    %c0_0 = arith.constant 0 : index
    %0 = vector.load %arg1[%c0, %c0_0] : memref<24x16xf32, #tpu.memory_space<vmem>>, vector<24x16xf32>
    %c0_1 = arith.constant 0 : index
    %c0_2 = arith.constant 0 : index
    %1 = vector.load %arg3[%c0_1, %c0_2] : memref<9x128xf32, #tpu.memory_space<vmem>>, vector<9x128xf32>
    %c0_3 = arith.constant 0 : index
    %c0_4 = arith.constant 0 : index
    %2 = vector.load %arg2[%c0_3, %c0_4] : memref<16x128xf32, #tpu.memory_space<vmem>>, vector<16x128xf32>
    %cst = arith.constant dense<0.000000e+00> : vector<24x128xf32>
    %3 = tpu.matmul %0, %2, %cst {dimension_numbers = #tpu.dot_dimension_numbers<[1], [0], [0], [1], [0, 0, 1, 1], [], []>} : vector<24x16xf32>, vector<16x128xf32>, vector<24x128xf32> -> vector<24x128xf32>
    %c0_5 = arith.constant 0 : index
    %c0_6 = arith.constant 0 : index
    %4 = vector.load %arg4[%c0_5, %c0_6] : memref<24x128xf32, #tpu.memory_space<vmem>>, vector<24x128xf32>
    tpu.vector_store %arg4[%c0_5, %c0_6], %3 {strides = array<i32>} : memref<24x128xf32, #tpu.memory_space<vmem>>, vector<24x128xf32>,
    %5 = vector.extract_strided_slice %0 {offsets = [0, 8], sizes = [24, 1], strides = [1, 1]} : vector<24x16xf32> to vector<24x1xf32>
    %6 = arith.fptosi %5 : vector<24x1xf32> to vector<24x1xi32>
    %7 = tpu.iota {dimensions = array<i32: 1>} : vector<24x9xi32>
    %8 = vector.broadcast %6 : vector<24x1xi32> to vector<24x9xi32>
    %9 = arith.cmpi eq, %7, %8 : vector<24x9xi32>
    %10 = arith.extui %9 : vector<24x9xi1> to vector<24x9xi32>
    %11 = arith.sitofp %10 : vector<24x9xi32> to vector<24x9xf32>
    %cst_7 = arith.constant dense<0.000000e+00> : vector<24x128xf32>
    %12 = tpu.matmul %11, %1, %cst_7 {dimension_numbers = #tpu.dot_dimension_numbers<[1], [0], [0], [1], [0, 0, 1, 1], [], []>} : vector<24x9xf32>, vector<9x128xf32>, vector<24x128xf32> -> vector<24x128xf32>
    %c0_8 = arith.constant 0 : index
    %c0_9 = arith.constant 0 : index
    %13 = vector.load %arg5[%c0_8, %c0_9] : memref<24x128xf32, #tpu.memory_space<vmem>>, vector<24x128xf32>
    tpu.vector_store %arg5[%c0_8, %c0_9], %12 {strides = array<i32>} : memref<24x128xf32, #tpu.memory_space<vmem>>, vector<24x128xf32>,
    return
  }
  func.func @transform_0(%arg0: i32) -> (i32, i32) {
    %c0_i32 = arith.constant 0 : i32
    %c0_i32_0 = arith.constant 0 : i32
    return %arg0, %c0_i32 : i32, i32
  }
  func.func @transform_1(%arg0: i32) -> (i32, i32) {
    %c0_i32 = arith.constant 0 : i32
    %c0_i32_0 = arith.constant 0 : i32
    %c0_i32_1 = arith.constant 0 : i32
    return %c0_i32, %c0_i32_0 : i32, i32
  }
  func.func @transform_2(%arg0: i32) -> (i32, i32) {
    %c0_i32 = arith.constant 0 : i32
    %c0_i32_0 = arith.constant 0 : i32
    %c0_i32_1 = arith.constant 0 : i32
    return %c0_i32, %c0_i32_0 : i32, i32
  }
  func.func @transform_3(%arg0: i32) -> (i32, i32) {
    %c0_i32 = arith.constant 0 : i32
    %c0_i32_0 = arith.constant 0 : i32
    return %arg0, %c0_i32 : i32, i32
  }
  func.func @transform_4(%arg0: i32) -> (i32, i32) {
    %c0_i32 = arith.constant 0 : i32
    %c0_i32_0 = arith.constant 0 : i32
    return %arg0, %c0_i32 : i32, i32
  }
}

</mosaic_0001>

<llo_original>
// kernel: improvement_encoder_forward.1
$region0: #{improvement_encoder_forward.1}
  #allocation0 [shape = 'u32[]', space=smem, size = 0x4, offset = 0x4, fixed_abs, tag = 'smem constant byte address 0x4 - core index']
  #allocation1 [shape = 'u32[144,128]{1,0:T(1,128)}', space=vmem, size = 0x12000, scoped, tag = 'internal scratch']
  %s0 = inlined_call_operand.vmem [shape: f32[24,16], index: 0, kind: input, shape index: {}]
  %s1 = inlined_call_operand.vmem [shape: f32[16,128], index: 1, kind: input, shape index: {}]
  %s2 = inlined_call_operand.vmem [shape: f32[9,128], index: 2, kind: input, shape index: {}]
  %s3 = inlined_call_operand.vmem [shape: f32[24,128], index: 3, kind: output, shape index: {0}]
  %s4 = inlined_call_operand.vmem [shape: f32[24,128], index: 4, kind: output, shape index: {1}]
  %5 = xla_tuple %s3, %s4
  %s6 = sld [smem:[#allocation0]]
  $region30: #{improvement_encoder_forward.1} parent=0
    _
  %s8 = ssub.s32 1, %s6
  %s9 = scalar_select 0, %s8, %s6
  // Predicated region
  $region2: #{improvement_encoder_forward.1} parent=0 // pred_check
    _
  $region3: #{improvement_encoder_forward.1} parent=0 // pred_check_branch
    %11 = sbr.rel (0) target = $region5
  $region4: #{improvement_encoder_forward.1} parent=0 // pred_region
    _
  $region5: #{improvement_encoder_forward.1} parent=0 // pred_fallthru
    _
  // Predicated region
  $region6: #{improvement_encoder_forward.1} parent=0 // pred_check
    _
  $region7: #{improvement_encoder_forward.1} parent=0 // pred_check_branch
    %13 = sbr.rel (0) target = $region9
  $region8: #{improvement_encoder_forward.1} parent=0 // pred_region
    _
  $region9: #{improvement_encoder_forward.1} parent=0 // pred_fallthru
    _
  // Predicated region
  $region10: #{improvement_encoder_forward.1} parent=0 // pred_check
    _
  $region11: #{improvement_encoder_forward.1} parent=0 // pred_check_branch
    %15 = sbr.rel (0) target = $region13
  $region12: #{improvement_encoder_forward.1} parent=0 // pred_region
    _
  $region13: #{improvement_encoder_forward.1} parent=0 // pred_fallthru
    _
  %v16 = vld [vmem:[%s0] sm:$0xff]
  %v17 = vld [vmem:[%s0 + $0x8] sm:$0xff]
  %v18 = vld [vmem:[%s0 + $0x10] sm:$0xff]
  %v19 = vld [vmem:[%s2] sm:$0xff]
  %v20 = vld [vmem:[%s2 + $0x8] sm:$0x1]
  %v21 = vld [vmem:[%s1] sm:$0xff]
  %v22 = vld [vmem:[%s1 + $0x8] sm:$0xff]
  %vm23 = vcmask 130048
  %v25 = vsel %vm23, %v16, 0
  %v28 = vsel %vm23, %v17, 0
  %v31 = vsel %vm23, %v18, 0
  %33 = vmatprep.subr.mxu0 0.0
  %34 = vmatpush1.msra.mxu0 0.0
  %35 = vmatprep.subr.mxu0 0.0
  %36 = vmatpush1.msra.mxu0 0.0
  %37 = vmatprep.subr.mxu0 0.0
  %38 = vmatpush1.msra.mxu0 0.0
  %39 = vmatprep.subr.mxu0 0.0
  %40 = vmatpush1.msra.mxu0 0.0
  %41 = vmatprep.subr.mxu0 0.0
  %42 = vmatpush1.msra.mxu0 0.0
  %43 = vmatprep.subr.mxu0 0.0
  %44 = vmatpush1.msra.mxu0 0.0
  %45 = vmatprep.subr.mxu0 0.0
  %46 = vmatpush1.msra.mxu0 0.0
  %47 = vmatprep.subr.mxu0 0.0
  %48 = vmatpush1.msra.mxu0 0.0
  %49 = vmatprep.subr.mxu0 0.0
  %50 = vmatpush1.msra.mxu0 0.0
  %51 = vmatprep.subr.mxu0 0.0
  %52 = vmatpush1.msra.mxu0 0.0
  %53 = vmatprep.subr.mxu0 0.0
  %54 = vmatpush1.msra.mxu0 0.0
  %55 = vmatprep.subr.mxu0 0.0
  %56 = vmatpush1.msra.mxu0 0.0
  %57 = vmatprep.subr.mxu0 0.0
  %58 = vmatpush1.msra.mxu0 0.0
  %59 = vmatprep.subr.mxu0 0.0
  %60 = vmatpush1.msra.mxu0 0.0
  %61 = vmatprep.subr.mxu0 0.0
  %62 = vmatpush1.msra.mxu0 %v22
  %63 = vmatprep.subr.mxu0 0.0
  %64 = vmatpush1.msra.mxu0 %v21
  %65 = vmatprep.subr.mxu0 0.0
  %66 = vmatpush2.msra.mxu0 0.0
  %67 = vmatprep.subr.mxu0 0.0
  %68 = vmatpush2.msra.mxu0 0.0
  %69 = vmatprep.subr.mxu0 0.0
  %70 = vmatpush2.msra.mxu0 0.0
  %71 = vmatprep.subr.mxu0 0.0
  %72 = vmatpush2.msra.mxu0 0.0
  %73 = vmatprep.subr.mxu0 0.0
  %74 = vmatpush2.msra.mxu0 0.0
  %75 = vmatprep.subr.mxu0 0.0
  %76 = vmatpush2.msra.mxu0 0.0
  %77 = vmatprep.subr.mxu0 0.0
  %78 = vmatpush2.msra.mxu0 0.0
  %79 = vmatprep.subr.mxu0 0.0
  %80 = vmatpush2.msra.mxu0 0.0
  %81 = vmatprep.subr.mxu0 0.0
  %82 = vmatpush2.msra.mxu0 0.0
  %83 = vmatprep.subr.mxu0 0.0
  %84 = vmatpush2.msra.mxu0 0.0
  %85 = vmatprep.subr.mxu0 0.0
  %86 = vmatpush2.msra.mxu0 0.0
  %87 = vmatprep.subr.mxu0 0.0
  %88 = vmatpush2.msra.mxu0 0.0
  %89 = vmatprep.subr.mxu0 0.0
  %90 = vmatpush2.msra.mxu0 0.0
  %91 = vmatprep.subr.mxu0 0.0
  %92 = vmatpush2.msra.mxu0 0.0
  %93 = vmatprep.subr.mxu0 0.0
  %94 = vmatpush2.msra.mxu0 0.0
  %95 = vmatprep.subr.mxu0 0.0
  %96 = vmatpush2.msra.mxu0 0.0
  %97 = vmatprep.mubr.f32.mxu0 0.0
  %98 = vmatmul.mubr.f32.gmra.mxu0 %v25
  %v99 = vpop.f32.mrf.mxu0
  %v100 = vadd.f32 0.0, %v99
  %v101 = vpop.f32.mrf.mxu0
  %102 = vmatprep.mubr.f32.mxu0 0.0
  %103 = vmatmul.mubr.f32.gmra.mxu0 %v28
  %v104 = vpop.f32.mrf.mxu0
  %v105 = vadd.f32 0.0, %v104
  %v106 = vpop.f32.mrf.mxu0
  %107 = vmatprep.mubr.f32.mxu0 0.0
  %108 = vmatmul.mubr.f32.gmra.mxu0 %v31
  %v109 = vpop.f32.mrf.mxu0
  %v110 = vadd.f32 0.0, %v109
  %v111 = vpop.f32.mrf.mxu0
  %112 = vdwg.mxu0
  %113 = vst [vmem:[%s3] sm:$0xff] %v100
  %114 = vst [vmem:[%s3 + $0x8] sm:$0xff] %v105
  %115 = vst [vmem:[%s3 + $0x10] sm:$0xff] %v110
  %v116 = vcvt.f32.s32.to.zero.pseudo %v16
  %v117 = vcvt.f32.s32.to.zero.pseudo %v17
  %v118 = vcvt.f32.s32.to.zero.pseudo %v18
  %v119 = vlaneseq
  %v120 = vand.u32 %v119, 127
  %121 = vset.pattern.permute.xlu0 8
  %122 = vperm.xlu0 %121, %v116
  %v123 = vpop.permute.xlu0 %122
  %124 = vset.pattern.permute.xlu0 8
  %125 = vperm.xlu0 %124, %v117
  %v126 = vpop.permute.xlu0 %125
  %127 = vset.pattern.permute.xlu0 8
  %128 = vperm.xlu0 %127, %v118
  %v129 = vpop.permute.xlu0 %128
  %vm130 = vcmp.eq.s32.totalorder %v120, %v123
  %vm131 = vcmp.eq.s32.totalorder %v120, %v126
  %vm132 = vcmp.eq.s32.totalorder %v120, %v129
  %v133 = vsel %vm130, 1, 0
  %v134 = vsel %vm131, 1, 0
  %v135 = vsel %vm132, 1, 0
  %v136 = vcvt.s32.f32 %v133
  %v137 = vcvt.s32.f32 %v134
  %v138 = vcvt.s32.f32 %v135
  %vm139 = vcmask 72704
  %v141 = vsel %vm139, %v136, 0
  %v144 = vsel %vm139, %v137, 0
  %v147 = vsel %vm139, %v138, 0
  %vm149 = vcmask 1040384
  %v151 = vsel %vm149, %v20, 0
  %153 = vmatprep.subr.mxu0 0.0
  %154 = vmatpush1.msra.mxu0 0.0
  %155 = vmatprep.subr.mxu0 0.0
  %156 = vmatpush1.msra.mxu0 0.0
  %157 = vmatprep.subr.mxu0 0.0
  %158 = vmatpush1.msra.mxu0 0.0
  %159 = vmatprep.subr.mxu0 0.0
  %160 = vmatpush1.msra.mxu0 0.0
  %161 = vmatprep.subr.mxu0 0.0
  %162 = vmatpush1.msra.mxu0 0.0
  %163 = vmatprep.subr.mxu0 0.0
  %164 = vmatpush1.msra.mxu0 0.0
  %165 = vmatprep.subr.mxu0 0.0
  %166 = vmatpush1.msra.mxu0 0.0
  %167 = vmatprep.subr.mxu0 0.0
  %168 = vmatpush1.msra.mxu0 0.0
  %169 = vmatprep.subr.mxu0 0.0
  %170 = vmatpush1.msra.mxu0 0.0
  %171 = vmatprep.subr.mxu0 0.0
  %172 = vmatpush1.msra.mxu0 0.0
  %173 = vmatprep.subr.mxu0 0.0
  %174 = vmatpush1.msra.mxu0 0.0
  %175 = vmatprep.subr.mxu0 0.0
  %176 = vmatpush1.msra.mxu0 0.0
  %177 = vmatprep.subr.mxu0 0.0
  %178 = vmatpush1.msra.mxu0 0.0
  %179 = vmatprep.subr.mxu0 0.0
  %180 = vmatpush1.msra.mxu0 0.0
  %181 = vmatprep.subr.mxu0 0.0
  %182 = vmatpush1.msra.mxu0 %v151
  %183 = vmatprep.subr.mxu0 0.0
  %184 = vmatpush1.msra.mxu0 %v19
  %185 = vmatprep.subr.mxu0 0.0
  %186 = vmatpush2.msra.mxu0 0.0
  %187 = vmatprep.subr.mxu0 0.0
  %188 = vmatpush2.msra.mxu0 0.0
  %189 = vmatprep.subr.mxu0 0.0
  %190 = vmatpush2.msra.mxu0 0.0
  %191 = vmatprep.subr.mxu0 0.0
  %192 = vmatpush2.msra.mxu0 0.0
  %193 = vmatprep.subr.mxu0 0.0
  %194 = vmatpush2.msra.mxu0 0.0
  %195 = vmatprep.subr.mxu0 0.0
  %196 = vmatpush2.msra.mxu0 0.0
  %197 = vmatprep.subr.mxu0 0.0
  %198 = vmatpush2.msra.mxu0 0.0
  %199 = vmatprep.subr.mxu0 0.0
  %200 = vmatpush2.msra.mxu0 0.0
  %201 = vmatprep.subr.mxu0 0.0
  %202 = vmatpush2.msra.mxu0 0.0
  %203 = vmatprep.subr.mxu0 0.0
  %204 = vmatpush2.msra.mxu0 0.0
  %205 = vmatprep.subr.mxu0 0.0
  %206 = vmatpush2.msra.mxu0 0.0
  %207 = vmatprep.subr.mxu0 0.0
  %208 = vmatpush2.msra.mxu0 0.0
  %209 = vmatprep.subr.mxu0 0.0
  %210 = vmatpush2.msra.mxu0 0.0
  %211 = vmatprep.subr.mxu0 0.0
  %212 = vmatpush2.msra.mxu0 0.0
  %213 = vmatprep.subr.mxu0 0.0
  %214 = vmatpush2.msra.mxu0 0.0
  %215 = vmatprep.subr.mxu0 0.0
  %216 = vmatpush2.msra.mxu0 0.0
  %217 = vmatprep.mubr.f32.mxu0 0.0
  %218 = vmatmul.mubr.f32.gmra.mxu0 %v141
  %v219 = vpop.f32.mrf.mxu0
  %v220 = vadd.f32 0.0, %v219
  %v221 = vpop.f32.mrf.mxu0
  %222 = vmatprep.mubr.f32.mxu0 0.0
  %223 = vmatmul.mubr.f32.gmra.mxu0 %v144
  %v224 = vpop.f32.mrf.mxu0
  %v225 = vadd.f32 0.0, %v224
  %v226 = vpop.f32.mrf.mxu0
  %227 = vmatprep.mubr.f32.mxu0 0.0
  %228 = vmatmul.mubr.f32.gmra.mxu0 %v147
  %v229 = vpop.f32.mrf.mxu0
  %v230 = vadd.f32 0.0, %v229
  %v231 = vpop.f32.mrf.mxu0
  %232 = vdwg.mxu0
  %233 = vst [vmem:[%s4] sm:$0xff] %v220
  %234 = vst [vmem:[%s4 + $0x8] sm:$0xff] %v225
  %235 = vst [vmem:[%s4 + $0x10] sm:$0xff] %v230
  // Predicated region
  $region14: #{improvement_encoder_forward.1} parent=0 // pred_check
    _
  $region15: #{improvement_encoder_forward.1} parent=0 // pred_check_branch
    %237 = sbr.rel (0) target = $region17
  $region16: #{improvement_encoder_forward.1} parent=0 // pred_region
    _
  $region17: #{improvement_encoder_forward.1} parent=0 // pred_fallthru
    _
  // Predicated region
  $region18: #{improvement_encoder_forward.1} parent=0 // pred_check
    _
  $region19: #{improvement_encoder_forward.1} parent=0 // pred_check_branch
    %239 = sbr.rel (0) target = $region21
  $region20: #{improvement_encoder_forward.1} parent=0 // pred_region
    _
  $region21: #{improvement_encoder_forward.1} parent=0 // pred_fallthru
    _
  // Predicated region
  $region22: #{improvement_encoder_forward.1} parent=0 // pred_check
    _
  $region23: #{improvement_encoder_forward.1} parent=0 // pred_check_branch
    %241 = sbr.rel (0) target = $region25
  $region24: #{improvement_encoder_forward.1} parent=0 // pred_region
    _
  $region25: #{improvement_encoder_forward.1} parent=0 // pred_fallthru
    _
  // Predicated region
  $region26: #{improvement_encoder_forward.1} parent=0 // pred_check
    _
  $region27: #{improvement_encoder_forward.1} parent=0 // pred_check_branch
    %243 = sbr.rel (0) target = $region29
  $region28: #{improvement_encoder_forward.1} parent=0 // pred_region
    _
  $region29: #{improvement_encoder_forward.1} parent=0 // pred_fallthru
    _

</llo_original>
